<compile_context>
chip_gen: v7x
topology: tpu7x:2x2x1
jax: 0.10.0
libtpu: 0.0.40
codegen_flags: <defaults>
</compile_context>

<pallas_src>
import jax
import jax.numpy as jnp
from jax.experimental import pallas as pl
from jax.experimental.pallas import tpu as pltpu

IN_FEATURES = 2       # nn.Linear(2, 8)
HIDDEN = 8            # nn.Linear(8, 1)
LANES = 128
SUBLANES = 8
MAX_TILE_ROWS = 2048  # rows of 128 lanes per grid step: 2 MiB x-tile + 1 MiB out-tile


def mlp_kernel(w1_ref, w2_ref, x_ref, o_ref):
    # w1_ref: (16,) f32 in SMEM -- Matrix1.weight (8, 2), flattened row-major
    # w2_ref: (8,)  f32 in SMEM -- Matrix2.weight (1, 8), flattened
    # x_ref:  (2, TR, 128) f32 in VMEM -- feature-major, batch on (sublane, lane)
    # o_ref:  (TR, 128) f32 in VMEM
    #
    # Fuse the two linear layers on the scalar unit:  (c0, c1) = W2 @ W1,
    # so the whole network is  out[b] = c0 * x0[b] + c1 * x1[b].
    c0 = w2_ref[0] * w1_ref[0]
    c1 = w2_ref[0] * w1_ref[1]
    for j in range(1, HIDDEN):
        c0 = c0 + w2_ref[j] * w1_ref[2 * j + 0]
        c1 = c1 + w2_ref[j] * w1_ref[2 * j + 1]

    # 3 VPU ops per full (8, 128) vreg; otherwise pure HBM streaming.
    o_ref[...] = c0 * x_ref[0] + c1 * x_ref[1]


def my_neural_network_forward(x, w1, w2):
    """x: (B, 2), w1: (8, 2), w2: (1, 8) -> same result as the PyTorch module."""
    B = x.shape[0]
    x = x.astype(jnp.float32)

    # Sublane- and lane-dense layout: flatten the batch onto (rows, 128) with
    # rows a multiple of 8 (full f32 vregs) and of the tile size (whole tiles).
    rows = pl.cdiv(B, LANES)
    rows = max(SUBLANES, pl.cdiv(rows, SUBLANES) * SUBLANES)
    tile_rows = min(MAX_TILE_ROWS, rows)
    rows = pl.cdiv(rows, tile_rows) * tile_rows
    bp = rows * LANES

    # TODO(synk): transpose+pad is an extra HBM pass over x at large B; a
    # feature-major producer (2, B) would remove it entirely.
    x_fm = jnp.pad(x.T, ((0, 0), (0, bp - B))).reshape(IN_FEATURES, rows, LANES)

    out = pl.pallas_call(
        mlp_kernel,
        out_shape=jax.ShapeDtypeStruct((rows, LANES), jnp.float32),
        grid=(rows // tile_rows,),
        in_specs=[
            pl.BlockSpec(memory_space=pltpu.MemorySpace.SMEM),   # w1 flat scalars
            pl.BlockSpec(memory_space=pltpu.MemorySpace.SMEM),   # w2 flat scalars
            pl.BlockSpec((IN_FEATURES, tile_rows, LANES), lambda i: (0, i, 0)),
        ],
        out_specs=pl.BlockSpec((tile_rows, LANES), lambda i: (i, 0)),
        compiler_params=pltpu.CompilerParams(
            dimension_semantics=("parallel",)),
    )(
        w1.astype(jnp.float32).reshape(-1),
        w2.astype(jnp.float32).reshape(-1),
        x_fm,
    )

    # (rows, 128) -> (B,); jnp.squeeze matches torch's x.squeeze()
    # (collapses to a scalar when B == 1, exactly like torch).
    return jnp.squeeze(out.reshape(-1)[:B])


if __name__ == "__main__":
    # Same input as the PyTorch script.
    x = jnp.array([[6, 2], [5, 2], [1, 3], [7, 6]], dtype=jnp.float32)

    # Deterministic parameters (shapes from the module's __init__):
    #   Matrix1: nn.Linear(2, 8, bias=False) -> weight (8, 2)
    #   Matrix2: nn.Linear(8, 1, bias=False) -> weight (1, 8)
    key = jax.random.PRNGKey(0)
    k1, k2, k3 = jax.random.split(key, 3)
    w1 = jax.random.uniform(k1, (8, 2), dtype=jnp.float32, minval=-0.5, maxval=0.5)
    w2 = jax.random.uniform(k2, (1, 8), dtype=jnp.float32, minval=-0.5, maxval=0.5)

    # Spec-sized case (B = 4).
    out = jax.block_until_ready(my_neural_network_forward(x, w1, w2))
    ref = jnp.squeeze((x @ w1.T) @ w2.T)
    assert out.shape == (4,), out.shape
    assert jnp.allclose(out, ref, atol=1e-5, rtol=1e-5), (out, ref)

    # Larger batch: exercises the multi-tile grid (double-buffered, parallel axis).
    xb = jax.random.normal(k3, (300_000, IN_FEATURES), dtype=jnp.float32)
    outb = jax.block_until_ready(my_neural_network_forward(xb, w1, w2))
    refb = jnp.squeeze((xb @ w1.T) @ w2.T)
    assert outb.shape == (300_000,), outb.shape
    assert jnp.allclose(outb, refb, atol=1e-4, rtol=1e-4), "large-batch mismatch"

    print("KERNEL_OK")
</pallas_src>

<mosaic_0001>
module attributes {stable_mosaic.version = 11 : i64} {
  func.func @mlp_kernel(%arg0: i32, %arg1: memref<16xf32, #tpu.memory_space<smem>>, %arg2: memref<8xf32, #tpu.memory_space<smem>>, %arg3: memref<2x8x128xf32, #tpu.memory_space<vmem>>, %arg4: memref<8x128xf32, #tpu.memory_space<vmem>>) attributes {dimension_semantics = [#tpu.dimension_semantics<parallel>], iteration_bounds = array<i64: 1>, scalar_prefetch = 0 : i64, scratch_operands = 0 : i64, tpu.core_type = #tpu.core_type<tc>, window_params = [{transform_indices = @transform_0, window_bounds = array<i64: 16>}, {transform_indices = @transform_1, window_bounds = array<i64: 8>}, {transform_indices = @transform_2, window_bounds = array<i64: 2, 8, 128>}, {transform_indices = @transform_3, window_bounds = array<i64: 8, 128>}]} {
    %c0 = arith.constant 0 : index
    %0 = memref.load %arg2[%c0] : memref<8xf32, #tpu.memory_space<smem>>
    %c0_0 = arith.constant 0 : index
    %1 = memref.load %arg1[%c0_0] : memref<16xf32, #tpu.memory_space<smem>>
    %2 = arith.mulf %0, %1 : f32
    %c0_1 = arith.constant 0 : index
    %3 = memref.load %arg2[%c0_1] : memref<8xf32, #tpu.memory_space<smem>>
    %c1 = arith.constant 1 : index
    %4 = memref.load %arg1[%c1] : memref<16xf32, #tpu.memory_space<smem>>
    %5 = arith.mulf %3, %4 : f32
    %c1_2 = arith.constant 1 : index
    %6 = memref.load %arg2[%c1_2] : memref<8xf32, #tpu.memory_space<smem>>
    %c2 = arith.constant 2 : index
    %7 = memref.load %arg1[%c2] : memref<16xf32, #tpu.memory_space<smem>>
    %8 = arith.mulf %6, %7 : f32
    %9 = arith.addf %2, %8 : f32
    %c1_3 = arith.constant 1 : index
    %10 = memref.load %arg2[%c1_3] : memref<8xf32, #tpu.memory_space<smem>>
    %c3 = arith.constant 3 : index
    %11 = memref.load %arg1[%c3] : memref<16xf32, #tpu.memory_space<smem>>
    %12 = arith.mulf %10, %11 : f32
    %13 = arith.addf %5, %12 : f32
    %c2_4 = arith.constant 2 : index
    %14 = memref.load %arg2[%c2_4] : memref<8xf32, #tpu.memory_space<smem>>
    %c4 = arith.constant 4 : index
    %15 = memref.load %arg1[%c4] : memref<16xf32, #tpu.memory_space<smem>>
    %16 = arith.mulf %14, %15 : f32
    %17 = arith.addf %9, %16 : f32
    %c2_5 = arith.constant 2 : index
    %18 = memref.load %arg2[%c2_5] : memref<8xf32, #tpu.memory_space<smem>>
    %c5 = arith.constant 5 : index
    %19 = memref.load %arg1[%c5] : memref<16xf32, #tpu.memory_space<smem>>
    %20 = arith.mulf %18, %19 : f32
    %21 = arith.addf %13, %20 : f32
    %c3_6 = arith.constant 3 : index
    %22 = memref.load %arg2[%c3_6] : memref<8xf32, #tpu.memory_space<smem>>
    %c6 = arith.constant 6 : index
    %23 = memref.load %arg1[%c6] : memref<16xf32, #tpu.memory_space<smem>>
    %24 = arith.mulf %22, %23 : f32
    %25 = arith.addf %17, %24 : f32
    %c3_7 = arith.constant 3 : index
    %26 = memref.load %arg2[%c3_7] : memref<8xf32, #tpu.memory_space<smem>>
    %c7 = arith.constant 7 : index
    %27 = memref.load %arg1[%c7] : memref<16xf32, #tpu.memory_space<smem>>
    %28 = arith.mulf %26, %27 : f32
    %29 = arith.addf %21, %28 : f32
    %c4_8 = arith.constant 4 : index
    %30 = memref.load %arg2[%c4_8] : memref<8xf32, #tpu.memory_space<smem>>
    %c8 = arith.constant 8 : index
    %31 = memref.load %arg1[%c8] : memref<16xf32, #tpu.memory_space<smem>>
    %32 = arith.mulf %30, %31 : f32
    %33 = arith.addf %25, %32 : f32
    %c4_9 = arith.constant 4 : index
    %34 = memref.load %arg2[%c4_9] : memref<8xf32, #tpu.memory_space<smem>>
    %c9 = arith.constant 9 : index
    %35 = memref.load %arg1[%c9] : memref<16xf32, #tpu.memory_space<smem>>
    %36 = arith.mulf %34, %35 : f32
    %37 = arith.addf %29, %36 : f32
    %c5_10 = arith.constant 5 : index
    %38 = memref.load %arg2[%c5_10] : memref<8xf32, #tpu.memory_space<smem>>
    %c10 = arith.constant 10 : index
    %39 = memref.load %arg1[%c10] : memref<16xf32, #tpu.memory_space<smem>>
    %40 = arith.mulf %38, %39 : f32
    %41 = arith.addf %33, %40 : f32
    %c5_11 = arith.constant 5 : index
    %42 = memref.load %arg2[%c5_11] : memref<8xf32, #tpu.memory_space<smem>>
    %c11 = arith.constant 11 : index
    %43 = memref.load %arg1[%c11] : memref<16xf32, #tpu.memory_space<smem>>
    %44 = arith.mulf %42, %43 : f32
    %45 = arith.addf %37, %44 : f32
    %c6_12 = arith.constant 6 : index
    %46 = memref.load %arg2[%c6_12] : memref<8xf32, #tpu.memory_space<smem>>
    %c12 = arith.constant 12 : index
    %47 = memref.load %arg1[%c12] : memref<16xf32, #tpu.memory_space<smem>>
    %48 = arith.mulf %46, %47 : f32
    %49 = arith.addf %41, %48 : f32
    %c6_13 = arith.constant 6 : index
    %50 = memref.load %arg2[%c6_13] : memref<8xf32, #tpu.memory_space<smem>>
    %c13 = arith.constant 13 : index
    %51 = memref.load %arg1[%c13] : memref<16xf32, #tpu.memory_space<smem>>
    %52 = arith.mulf %50, %51 : f32
    %53 = arith.addf %45, %52 : f32
    %c7_14 = arith.constant 7 : index
    %54 = memref.load %arg2[%c7_14] : memref<8xf32, #tpu.memory_space<smem>>
    %c14 = arith.constant 14 : index
    %55 = memref.load %arg1[%c14] : memref<16xf32, #tpu.memory_space<smem>>
    %56 = arith.mulf %54, %55 : f32
    %57 = arith.addf %49, %56 : f32
    %c7_15 = arith.constant 7 : index
    %58 = memref.load %arg2[%c7_15] : memref<8xf32, #tpu.memory_space<smem>>
    %c15 = arith.constant 15 : index
    %59 = memref.load %arg1[%c15] : memref<16xf32, #tpu.memory_space<smem>>
    %60 = arith.mulf %58, %59 : f32
    %61 = arith.addf %53, %60 : f32
    %c0_16 = arith.constant 0 : index
    %c0_17 = arith.constant 0 : index
    %c0_18 = arith.constant 0 : index
    %62 = vector.load %arg3[%c0_16, %c0_17, %c0_18] : memref<2x8x128xf32, #tpu.memory_space<vmem>>, vector<1x8x128xf32>
    %63 = vector.shape_cast %62 : vector<1x8x128xf32> to vector<8x128xf32>
    %64 = vector.broadcast %57 : f32 to vector<8x128xf32>
    %65 = arith.mulf %64, %63 : vector<8x128xf32>
    %c1_19 = arith.constant 1 : index
    %c0_20 = arith.constant 0 : index
    %c0_21 = arith.constant 0 : index
    %66 = vector.load %arg3[%c1_19, %c0_20, %c0_21] : memref<2x8x128xf32, #tpu.memory_space<vmem>>, vector<1x8x128xf32>
    %67 = vector.shape_cast %66 : vector<1x8x128xf32> to vector<8x128xf32>
    %68 = vector.broadcast %61 : f32 to vector<8x128xf32>
    %69 = arith.mulf %68, %67 : vector<8x128xf32>
    %70 = arith.addf %65, %69 : vector<8x128xf32>
    %c0_22 = arith.constant 0 : index
    %c0_23 = arith.constant 0 : index
    %71 = vector.load %arg4[%c0_22, %c0_23] : memref<8x128xf32, #tpu.memory_space<vmem>>, vector<8x128xf32>
    tpu.vector_store %arg4[%c0_22, %c0_23], %70 {strides = array<i32>} : memref<8x128xf32, #tpu.memory_space<vmem>>, vector<8x128xf32>,
    return
  }
  func.func @transform_0(%arg0: i32) -> i32 {
    %c0_i32 = arith.constant 0 : i32
    %c0_i32_0 = arith.constant 0 : i32
    return %c0_i32 : i32
  }
  func.func @transform_1(%arg0: i32) -> i32 {
    %c0_i32 = arith.constant 0 : i32
    %c0_i32_0 = arith.constant 0 : i32
    return %c0_i32 : i32
  }
  func.func @transform_2(%arg0: i32) -> (i32, i32, i32) {
    %c0_i32 = arith.constant 0 : i32
    %c0_i32_0 = arith.constant 0 : i32
    %c0_i32_1 = arith.constant 0 : i32
    return %c0_i32, %arg0, %c0_i32_0 : i32, i32, i32
  }
  func.func @transform_3(%arg0: i32) -> (i32, i32) {
    %c0_i32 = arith.constant 0 : i32
    %c0_i32_0 = arith.constant 0 : i32
    return %arg0, %c0_i32 : i32, i32
  }
}

</mosaic_0001>

<llo_original>
// kernel: tpu_custom_call.1
$region0: #{tpu_custom_call.1}
  #allocation0 [shape = 'u32[]', space=smem, size = 0x4, offset = 0x4, fixed_abs, tag = 'smem constant byte address 0x4 - core index']
  #allocation1 [shape = 'u32[144,128]{1,0:T(1,128)}', space=vmem, size = 0x12000, scoped, tag = 'internal scratch']
  %s0 = inlined_call_operand.hbm [shape: f32[16], index: 0, kind: input, shape index: {}]
  %s1 = inlined_call_operand.vmem [shape: f32[8], index: 1, kind: input, shape index: {}]
  %s2 = inlined_call_operand.hbm [shape: f32[2,8,128], index: 2, kind: input, shape index: {}]
  %s3 = inlined_call_operand.hbm [shape: f32[8,128], index: 3, kind: output, shape index: {}]
  %s4 = sld [smem:[#allocation0]]
  $region34: #{tpu_custom_call.1} parent=0
    _
  %s6 = ssub.s32 1, %s4
  %s7 = scalar_select 0, %s6, %s4
  $region1: #{tpu_custom_call.1} parent=0
    #allocation2 [shape = 'u8[512]{0}', space=smem, size = 0x200, scoped, tag = 'input window, operand 0, single buffered']
    #allocation3 [shape = 's32[1]{0}', space=sflag, size = 0x4, scoped, tag = 'scoped memory for tpu_custom_call.1']
    #allocation4 [shape = 's32[1]{0}', space=sflag, size = 0x4, scoped, tag = 'scoped memory for tpu_custom_call.1']
    #allocation5 [shape = 's32[1]{0}', space=sflag, size = 0x4, scoped, tag = 'scoped memory for tpu_custom_call.1']
    #allocation6 [shape = 's32[1]{0}', space=sflag, size = 0x4, scoped, tag = 'scoped memory for tpu_custom_call.1']
    #allocation7 [shape = 'u8[512]{0}', space=smem, size = 0x200, scoped, tag = 'input window, operand 1, single buffered']
    #allocation8 [shape = 'u8[8192]{0}', space=vmem, size = 0x2000, scoped, tag = 'input window, operand 2, single buffered']
    #allocation9 [shape = 'u8[4096]{0}', space=vmem, size = 0x1000, scoped, tag = 'output window, operand 0, single buffered']
    %8 = vsyncpa [#allocation5], 0
    %9 = vsyncpa [#allocation6], 0
    %10 = vsyncpa [#allocation3], 0
    %11 = vsyncpa [#allocation4], 0
    // Predicated region
    $region2: #{tpu_custom_call.1} parent=1 // pred_check
      _
    $region3: #{tpu_custom_call.1} parent=1 // pred_check_branch
      %13 = sbr.rel (0) target = $region5
    $region4: #{tpu_custom_call.1} parent=1 // pred_region
      %s15 = ssub.s32 16, 16
      %16 = vsyncadd [#allocation5], %s15
      %19 = dma.hbm_to_smem %s0, 16, [#allocation2], [#allocation5]
    $region5: #{tpu_custom_call.1} parent=1 // pred_fallthru
      _
    // Predicated region
    $region6: #{tpu_custom_call.1} parent=1 // pred_check
      _
    $region7: #{tpu_custom_call.1} parent=1 // pred_check_branch
      %21 = sbr.rel (0) target = $region9
    $region8: #{tpu_custom_call.1} parent=1 // pred_region
      %s23 = ssub.s32 16, 16
      %24 = vsyncadd [#allocation6], %s23
      %s26 = sshll.u32 %s1, 4
      %s27 = int_to_ptr.vmem [resolvable:$true] %s26
      %29 = dma.vmem_to_smem %s27, 16, [#allocation7], [#allocation6]
    $region9: #{tpu_custom_call.1} parent=1 // pred_fallthru
      _
    // Predicated region
    $region10: #{tpu_custom_call.1} parent=1 // pred_check
      _
    $region11: #{tpu_custom_call.1} parent=1 // pred_check_branch
      %31 = sbr.rel (0) target = $region13
    $region12: #{tpu_custom_call.1} parent=1 // pred_region
      %s33 = ssub.s32 256, 256
      %34 = vsyncadd [#allocation3], %s33
      %s35 = sshll.u32 [#allocation8], 4
      %s36 = int_to_ptr.vmem [resolvable:$true] %s35
      %41 = dma.hbm_to_vmem [thread:$0]  %s2, 256, %s36, [#allocation3], 128, 128, 8
    $region13: #{tpu_custom_call.1} parent=1 // pred_fallthru
      _
    // Predicated region
    $region14: #{tpu_custom_call.1} parent=1 // pred_check
      _
    $region15: #{tpu_custom_call.1} parent=1 // pred_check_branch
      %43 = sbr.rel (0) target = $region17
    $region16: #{tpu_custom_call.1} parent=1 // pred_region
      %44 = dma.done [#allocation5], 16
    $region17: #{tpu_custom_call.1} parent=1 // pred_fallthru
      _
    // Predicated region
    $region18: #{tpu_custom_call.1} parent=1 // pred_check
      _
    $region19: #{tpu_custom_call.1} parent=1 // pred_check_branch
      %46 = sbr.rel (0) target = $region21
    $region20: #{tpu_custom_call.1} parent=1 // pred_region
      %47 = dma.done [#allocation6], 16
    $region21: #{tpu_custom_call.1} parent=1 // pred_fallthru
      _
    // Predicated region
    $region22: #{tpu_custom_call.1} parent=1 // pred_check
      _
    $region23: #{tpu_custom_call.1} parent=1 // pred_check_branch
      %49 = sbr.rel (0) target = $region25
    $region24: #{tpu_custom_call.1} parent=1 // pred_region
      %50 = dma.done [#allocation3], 256
    $region25: #{tpu_custom_call.1} parent=1 // pred_fallthru
      _
    %51 = sfence
    %s52 = sld [smem:[#allocation7]]
    %s53 = sld [smem:[#allocation2]]
    %s54 = smul.f32 %s52, %s53
    %s55 = sld [smem:[#allocation2 + $0x1]]
    %s56 = smul.f32 %s52, %s55
    %s57 = sld [smem:[#allocation7 + $0x1]]
    %s58 = sld [smem:[#allocation2 + $0x2]]
    %s59 = smul.f32 %s57, %s58
    %s60 = sadd.f32 %s54, %s59
    %s61 = sld [smem:[#allocation2 + $0x3]]
    %s62 = smul.f32 %s57, %s61
    %s63 = sadd.f32 %s56, %s62
    %s64 = sld [smem:[#allocation7 + $0x2]]
    %s65 = sld [smem:[#allocation2 + $0x4]]
    %s66 = smul.f32 %s64, %s65
    %s67 = sadd.f32 %s60, %s66
    %s68 = sld [smem:[#allocation2 + $0x5]]
    %s69 = smul.f32 %s64, %s68
    %s70 = sadd.f32 %s63, %s69
    %s71 = sld [smem:[#allocation7 + $0x3]]
    %s72 = sld [smem:[#allocation2 + $0x6]]
    %s73 = smul.f32 %s71, %s72
    %s74 = sadd.f32 %s67, %s73
    %s75 = sld [smem:[#allocation2 + $0x7]]
    %s76 = smul.f32 %s71, %s75
    %s77 = sadd.f32 %s70, %s76
    %s78 = sld [smem:[#allocation7 + $0x4]]
    %s79 = sld [smem:[#allocation2 + $0x8]]
    %s80 = smul.f32 %s78, %s79
    %s81 = sadd.f32 %s74, %s80
    %s82 = sld [smem:[#allocation2 + $0x9]]
    %s83 = smul.f32 %s78, %s82
    %s84 = sadd.f32 %s77, %s83
    %s85 = sld [smem:[#allocation7 + $0x5]]
    %s86 = sld [smem:[#allocation2 + $0xa]]
    %s87 = smul.f32 %s85, %s86
    %s88 = sadd.f32 %s81, %s87
    %s89 = sld [smem:[#allocation2 + $0xb]]
    %s90 = smul.f32 %s85, %s89
    %s91 = sadd.f32 %s84, %s90
    %s92 = sld [smem:[#allocation7 + $0x6]]
    %s93 = sld [smem:[#allocation2 + $0xc]]
    %s94 = smul.f32 %s92, %s93
    %s95 = sadd.f32 %s88, %s94
    %s96 = sld [smem:[#allocation2 + $0xd]]
    %s97 = smul.f32 %s92, %s96
    %s98 = sadd.f32 %s91, %s97
    %s99 = sld [smem:[#allocation7 + $0x7]]
    %s100 = sld [smem:[#allocation2 + $0xe]]
    %s101 = smul.f32 %s99, %s100
    %s102 = sadd.f32 %s95, %s101
    %s103 = sld [smem:[#allocation2 + $0xf]]
    %s104 = smul.f32 %s99, %s103
    %s105 = sadd.f32 %s98, %s104
    %v106 = vld [vmem:[#allocation8] sm:$0xff]
    %v107 = vstv %s102
    %v108 = vmul.f32 %v107, %v106
    %s109 = scalar_lea.vmem [#allocation8], 8
    %v110 = vld [vmem:[%s109] sm:$0xff]
    %v111 = vstv %s105
    %v112 = vmul.f32 %v111, %v110
    %v113 = vadd.f32 %v108, %v112
    %114 = vst [vmem:[#allocation9] sm:$0xff] %v113
    // Predicated region
    $region26: #{tpu_custom_call.1} parent=1 // pred_check
      _
    $region27: #{tpu_custom_call.1} parent=1 // pred_check_branch
      %116 = sbr.rel (0) target = $region29
    $region28: #{tpu_custom_call.1} parent=1 // pred_region
      %s118 = ssub.s32 128, 128
      %119 = vsyncadd [#allocation4], %s118
      %s121 = sshll.u32 [#allocation9], 4
      %s122 = int_to_ptr.vmem [resolvable:$true] %s121
      %124 = dma.vmem_to_hbm [thread:$0]  %s122, 128, %s3, [#allocation4]
    $region29: #{tpu_custom_call.1} parent=1 // pred_fallthru
      _
    // Predicated region
    $region30: #{tpu_custom_call.1} parent=1 // pred_check
      _
    $region31: #{tpu_custom_call.1} parent=1 // pred_check_branch
      %126 = sbr.rel (0) target = $region33
    $region32: #{tpu_custom_call.1} parent=1 // pred_region
      %127 = dma.done [#allocation4], 128
    $region33: #{tpu_custom_call.1} parent=1 // pred_fallthru
      _
    %128 = vsyncpa [#allocation3], 1
    %129 = vsyncpa [#allocation4], 1
    %130 = vsyncpa [#allocation5], 1
    %131 = vsyncpa [#allocation6], 1

</llo_original>
